<compile_context>
chip_gen: v7x
topology: tpu7x:2x2x1
jax: 0.10.0
libtpu: 0.0.40
codegen_flags: <defaults>
</compile_context>

<pallas_src>
import functools

import jax
import jax.numpy as jnp
from jax.experimental import pallas as pl
from jax.experimental.pallas import tpu as pltpu

BN_EPS = 1e-5                  # nn.BatchNorm2d default
_LANE = 128
_SUBLANE = 8
_TC_CAP = 256                  # max channel tile (sublane axis)
_UNROLL_ELEMS = 8192           # per-channel elements reduced per pass-1 call (64 chunks)


def _round_up(x, m):
    return (x + m - 1) // m * m


def _largest_divisor(n, unit, cap):
    """Largest d with d % unit == 0, d | n, d <= cap (assumes unit | n)."""
    cap = max(unit, min(cap, n))
    best = unit
    d = unit
    while d <= cap:
        if n % d == 0:
            best = d
        d += unit
    return best


def _vmem_limit_bytes():
    """Generation-aware VMEM budget: ~half of physical VMEM (64 MiB on v5e/v6e,
    32 MiB on v7x); conservative fallback if the query is unavailable."""
    try:
        cap = pltpu.get_tpu_info().vmem_capacity_bytes
        return max(16 << 20, min(cap // 2, 96 << 20))
    except Exception:
        return 32 << 20


# --------------------------- Pallas kernels ---------------------------------

def _bn_stats_kernel(x_ref, sum_ref, sq_ref):
    """Pass 1: per-channel partial sum / sum-of-squares.

    x block: (TN, TC, TS).  Outputs are lane-dense (TC, 128) partials accumulated
    with pure VALU adds over 128-lane chunks (no in-loop cross-lane reduce and no
    masked width-1 stores); the final lane reduce happens once in the XLA glue.
    """
    @pl.when((pl.program_id(1) == 0) & (pl.program_id(2) == 0))
    def _init():
        sum_ref[...] = jnp.zeros_like(sum_ref)
        sq_ref[...] = jnp.zeros_like(sq_ref)

    tn = x_ref.shape[0]
    n_chunks = x_ref.shape[-1] // _LANE
    s_part = jnp.zeros((x_ref.shape[1], _LANE), jnp.float32)
    q_part = jnp.zeros_like(s_part)
    for b in range(tn):                          # static unroll, bounded <= 64 total
        for j in range(n_chunks):
            c = x_ref[b, :, j * _LANE:(j + 1) * _LANE].astype(jnp.float32)
            s_part = s_part + c
            q_part = q_part + c * c
    sum_ref[...] += s_part
    sq_ref[...] += q_part


def _bn_apply_kernel(x_ref, ss_ref, o_ref):
    """Pass 2: y = x * scale + shift (one FMA per element, f32 math in vregs)."""
    x = x_ref[...].astype(jnp.float32)           # (TN, TC, TS)
    scale = ss_ref[:, :, 0:1]                    # (TN, TC, 1) f32
    shift = ss_ref[:, :, 1:2]
    o_ref[...] = (x * scale + shift).astype(o_ref.dtype)


def _fused_kernel(x_ref, g_ref, b_ref, o_ref, *, inv_count, eps):
    """Single-pass fast path: x resident in VMEM; stats + apply in one kernel."""
    x = x_ref[...].astype(jnp.float32)                     # (N, C, S)
    s1 = jnp.sum(x, axis=2, keepdims=True)                 # (N, C, 1)
    s2 = jnp.sum(x * x, axis=2, keepdims=True)
    s1 = jnp.sum(s1, axis=0, keepdims=True)                # (1, C, 1)
    s2 = jnp.sum(s2, axis=0, keepdims=True)
    mean = s1 * inv_count
    var = jnp.maximum(s2 * inv_count - mean * mean, 0.0)   # clamp cancellation
    inv_std = jax.lax.rsqrt(var + eps)
    scale = g_ref[...] * inv_std                           # (N, C, 1)
    shift = b_ref[...] - mean * scale
    o_ref[...] = (x * scale + shift).astype(o_ref.dtype)


# --------------------------- forward wrapper ---------------------------------

def conditional_norm(x, label, embed_w, embed_b, *, eps=BN_EPS, fused=None):
    """Forward of the PyTorch ConditionalNorm module.

    x: (N, C, H, W); label: (N, n_condition); embed_w: (2C, n_condition); embed_b: (2C,)
    fused: None = auto dispatch, False = force the tiled two-pass path.
    """
    N, C, H, W = x.shape
    S = H * W
    x3 = x.reshape(N, C, S)

    # Conditioning linear (tiny: O(N * n_cond * C)) — plain XLA.
    emb = (label.astype(jnp.float32) @ embed_w.astype(jnp.float32).T
           + embed_b.astype(jnp.float32))                  # (N, 2C)
    gamma, beta = emb[:, :C], emb[:, C:]                   # out = gamma * xhat + beta

    vmem_limit = _vmem_limit_bytes()
    itemsize = jnp.dtype(x.dtype).itemsize
    x_f32_bytes = N * C * S * 4
    if fused is None:
        fused = 6 * x_f32_bytes <= vmem_limit              # room for x, out, f32 temps

    # ------------------------ fused single-pass path ----------------------------
    if fused:
        out = pl.pallas_call(
            functools.partial(_fused_kernel, inv_count=1.0 / (N * S), eps=float(eps)),
            out_shape=jax.ShapeDtypeStruct((N, C, S), x.dtype),
            compiler_params=pltpu.CompilerParams(vmem_limit_bytes=vmem_limit),
        )(x3, gamma[:, :, None], beta[:, :, None])
        return out.reshape(N, C, H, W)

    # ------------------------- tiled two-pass path -------------------------------
    # Minimal hardware-granularity padding only; a no-op (no HBM copies) for aligned
    # shapes.  Zero padding is stats-safe: the true element count is used below.
    C_pad = _round_up(C, _SUBLANE)
    S_pad = _round_up(S, _LANE)
    x3p = x3
    if (C_pad, S_pad) != (C, S):
        x3p = jnp.pad(x3, ((0, 0), (0, C_pad - C), (0, S_pad - S)))

    # Channel tile: keep >= 2 channel tiles when possible so pass 1 has >= 2 "parallel"
    # programs (both v7x TensorCores busy); harmless on v5e/v6e.
    tc_cap = _TC_CAP if C_pad < 2 * _SUBLANE else min(_TC_CAP, C_pad // 2)
    TC = _largest_divisor(C_pad, _SUBLANE, tc_cap)

    # Pass-1 blocks: input only, double buffered (2 blocks <= ~half the budget).
    p1_elems = max(_LANE, (vmem_limit // 4) // (TC * itemsize))
    TS1 = _largest_divisor(S_pad, _LANE, min(p1_elems, _UNROLL_ELEMS))
    TN1 = _largest_divisor(N, 1, max(1, min(p1_elems // TS1, _UNROLL_ELEMS // TS1)))

    # Pass-2 blocks: input + output double buffered (4 blocks <= ~half the budget).
    p2_elems = max(_LANE, (vmem_limit // 8) // (TC * itemsize))
    TS2 = _largest_divisor(S_pad, _LANE, p2_elems)
    TN2 = _largest_divisor(N, 1, max(1, p2_elems // TS2))

    # ---- pass 1: per-channel batch statistics (single streamed pass over x) ----
    csum, csq = pl.pallas_call(
        _bn_stats_kernel,
        out_shape=(jax.ShapeDtypeStruct((C_pad, _LANE), jnp.float32),
                   jax.ShapeDtypeStruct((C_pad, _LANE), jnp.float32)),
        grid_spec=pltpu.PrefetchScalarGridSpec(
            num_scalar_prefetch=0,
            grid=(C_pad // TC, N // TN1, S_pad // TS1),
            in_specs=[pl.BlockSpec((TN1, TC, TS1), lambda c, n, s: (n, c, s))],
            out_specs=[pl.BlockSpec((TC, _LANE), lambda c, n, s: (c, 0)),
                       pl.BlockSpec((TC, _LANE), lambda c, n, s: (c, 0))],
        ),
        compiler_params=pltpu.CompilerParams(
            dimension_semantics=("parallel", "arbitrary", "arbitrary"),
            vmem_limit_bytes=vmem_limit),
    )(x3p)

    # ---- conditioning glue (tiny: O(N*C)) ---------------------------------------
    count = jnp.float32(N * S)                       # true per-channel element count
    mean = jnp.sum(csum, axis=1)[:C] / count
    var = jnp.maximum(jnp.sum(csq, axis=1)[:C] / count - mean * mean, 0.0)
    inv_std = jax.lax.rsqrt(var + eps)
    scale = gamma * inv_std[None, :]                 # (N, C)
    shift = beta - mean[None, :] * scale
    ss = jnp.stack([scale, shift], axis=-1)          # (N, C, 2) fused operand
    if C_pad != C:
        ss = jnp.pad(ss, ((0, 0), (0, C_pad - C), (0, 0)))

    # ---- pass 2: apply folded scale/shift ---------------------------------------
    out = pl.pallas_call(
        _bn_apply_kernel,
        out_shape=jax.ShapeDtypeStruct((N, C_pad, S_pad), x.dtype),
        grid_spec=pltpu.PrefetchScalarGridSpec(
            num_scalar_prefetch=0,
            grid=(N // TN2, C_pad // TC, S_pad // TS2),
            in_specs=[pl.BlockSpec((TN2, TC, TS2), lambda n, c, s: (n, c, s)),
                      pl.BlockSpec((TN2, TC, 2), lambda n, c, s: (n, c, 0))],
            out_specs=pl.BlockSpec((TN2, TC, TS2), lambda n, c, s: (n, c, s)),
        ),
        compiler_params=pltpu.CompilerParams(
            dimension_semantics=("parallel", "parallel", "parallel"),
            vmem_limit_bytes=vmem_limit),
    )(x3p, ss)

    if (C_pad, S_pad) != (C, S):
        out = out[:, :C, :S]
    return out.reshape(N, C, H, W)


# --------------------------- reference & self-test ---------------------------

def _reference(x, label, embed_w, embed_b, eps=BN_EPS):
    mean = x.mean(axis=(0, 2, 3), keepdims=True)
    var = ((x - mean) ** 2).mean(axis=(0, 2, 3), keepdims=True)
    xhat = (x - mean) / jnp.sqrt(var + eps)
    emb = label @ embed_w.T + embed_b
    C = x.shape[1]
    gamma = emb[:, :C][:, :, None, None]
    beta = emb[:, C:][:, :, None, None]
    return gamma * xhat + beta


if __name__ == "__main__":
    root = jax.random.PRNGKey(0)

    # (N, C, H, W, n_condition): an aligned case and a ragged (C%8!=0, S%128!=0) case.
    cases = [(2, 4, 16, 16, 16), (2, 6, 5, 5, 12)]
    for idx, (N, C, H, W, n_cond) in enumerate(cases):
        kx, kl, kw, kb = jax.random.split(jax.random.fold_in(root, idx), 4)
        x = jax.random.normal(kx, (N, C, H, W), jnp.float32)
        label = jax.random.normal(kl, (N, n_cond), jnp.float32)
        # Linear(n_condition, 2C): weight (2C, n_cond), bias (2C,).  (The module's
        # orthogonal/zero init only changes parameter values, not the forward math.)
        embed_w = 0.2 * jax.random.normal(kw, (2 * C, n_cond), jnp.float32)
        embed_b = 0.1 * jax.random.normal(kb, (2 * C,), jnp.float32)

        ref = _reference(x, label, embed_w, embed_b)
        # fused=None -> auto (fused single-pass for these small shapes);
        # fused=False -> force the tiled two-pass path so both are exercised.
        for force in (None, False):
            fwd = jax.jit(functools.partial(conditional_norm, eps=BN_EPS, fused=force))
            out = jax.block_until_ready(fwd(x, label, embed_w, embed_b))
            assert out.shape == (N, C, H, W)
            assert bool(jnp.all(jnp.isfinite(out)))
            max_err = float(jnp.max(jnp.abs(out - ref)))
            assert jnp.allclose(out, ref, atol=1e-4, rtol=1e-4), (idx, force, max_err)

    print("KERNEL_OK")
</pallas_src>

<mosaic_0001>
module attributes {stable_mosaic.version = 11 : i64} {
  func.func @_fused_kernel(%arg0: memref<2x4x256xf32, #tpu.memory_space<vmem>>, %arg1: memref<2x4x1xf32, #tpu.memory_space<vmem>>, %arg2: memref<2x4x1xf32, #tpu.memory_space<vmem>>, %arg3: memref<2x4x256xf32, #tpu.memory_space<vmem>>) attributes {dimension_semantics = [], scalar_prefetch = 0 : i64, scratch_operands = 0 : i64, tpu.core_type = #tpu.core_type<tc>} {
    %c0 = arith.constant 0 : index
    %c0_0 = arith.constant 0 : index
    %c0_1 = arith.constant 0 : index
    %0 = vector.load %arg0[%c0, %c0_0, %c0_1] : memref<2x4x256xf32, #tpu.memory_space<vmem>>, vector<2x4x256xf32>
    %cst = arith.constant dense<0.000000e+00> : vector<2x4xf32>
    %1 = vector.multi_reduction <add>, %0, %cst [2] : vector<2x4x256xf32> to vector<2x4xf32>
    %2 = vector.shape_cast %1 : vector<2x4xf32> to vector<2x4x1xf32>
    %3 = arith.mulf %0, %0 : vector<2x4x256xf32>
    %cst_2 = arith.constant dense<0.000000e+00> : vector<2x4xf32>
    %4 = vector.multi_reduction <add>, %3, %cst_2 [2] : vector<2x4x256xf32> to vector<2x4xf32>
    %5 = vector.shape_cast %4 : vector<2x4xf32> to vector<2x4x1xf32>
    %cst_3 = arith.constant dense<0.000000e+00> : vector<4x1xf32>
    %6 = vector.multi_reduction <add>, %2, %cst_3 [0] : vector<2x4x1xf32> to vector<4x1xf32>
    %7 = vector.shape_cast %6 : vector<4x1xf32> to vector<1x4x1xf32>
    %cst_4 = arith.constant dense<0.000000e+00> : vector<4x1xf32>
    %8 = vector.multi_reduction <add>, %5, %cst_4 [0] : vector<2x4x1xf32> to vector<4x1xf32>
    %9 = vector.shape_cast %8 : vector<4x1xf32> to vector<1x4x1xf32>
    %cst_5 = arith.constant 0.001953125 : f32
    %10 = vector.broadcast %cst_5 : f32 to vector<1x4x1xf32>
    %11 = arith.mulf %7, %10 : vector<1x4x1xf32>
    %cst_6 = arith.constant 0.001953125 : f32
    %12 = vector.broadcast %cst_6 : f32 to vector<1x4x1xf32>
    %13 = arith.mulf %9, %12 : vector<1x4x1xf32>
    %14 = arith.mulf %11, %11 : vector<1x4x1xf32>
    %15 = arith.subf %13, %14 : vector<1x4x1xf32>
    %cst_7 = arith.constant 0.000000e+00 : f32
    %16 = vector.broadcast %cst_7 : f32 to vector<1x4x1xf32>
    %17 = arith.maximumf %15, %16 : vector<1x4x1xf32>
    %cst_8 = arith.constant 9.99999974E-6 : f32
    %18 = vector.broadcast %cst_8 : f32 to vector<1x4x1xf32>
    %19 = arith.addf %17, %18 : vector<1x4x1xf32>
    %20 = math.rsqrt %19 : vector<1x4x1xf32>
    %c0_9 = arith.constant 0 : index
    %c0_10 = arith.constant 0 : index
    %c0_11 = arith.constant 0 : index
    %21 = vector.load %arg1[%c0_9, %c0_10, %c0_11] : memref<2x4x1xf32, #tpu.memory_space<vmem>>, vector<2x4x1xf32>
    %22 = vector.broadcast %20 : vector<1x4x1xf32> to vector<2x4x1xf32>
    %23 = arith.mulf %21, %22 : vector<2x4x1xf32>
    %c0_12 = arith.constant 0 : index
    %c0_13 = arith.constant 0 : index
    %c0_14 = arith.constant 0 : index
    %24 = vector.load %arg2[%c0_12, %c0_13, %c0_14] : memref<2x4x1xf32, #tpu.memory_space<vmem>>, vector<2x4x1xf32>
    %25 = vector.broadcast %11 : vector<1x4x1xf32> to vector<2x4x1xf32>
    %26 = arith.mulf %25, %23 : vector<2x4x1xf32>
    %27 = arith.subf %24, %26 : vector<2x4x1xf32>
    %28 = vector.broadcast %23 : vector<2x4x1xf32> to vector<2x4x256xf32>
    %29 = arith.mulf %0, %28 : vector<2x4x256xf32>
    %30 = vector.broadcast %27 : vector<2x4x1xf32> to vector<2x4x256xf32>
    %31 = arith.addf %29, %30 : vector<2x4x256xf32>
    %c0_15 = arith.constant 0 : index
    %c0_16 = arith.constant 0 : index
    %c0_17 = arith.constant 0 : index
    %32 = vector.load %arg3[%c0_15, %c0_16, %c0_17] : memref<2x4x256xf32, #tpu.memory_space<vmem>>, vector<2x4x256xf32>
    tpu.vector_store %arg3[%c0_15, %c0_16, %c0_17], %31 {strides = array<i32>} : memref<2x4x256xf32, #tpu.memory_space<vmem>>, vector<2x4x256xf32>,
    return
  }
}

</mosaic_0001>

<llo_original>
// kernel: conditional_norm.1
$region0: #{conditional_norm.1}
  #allocation0 [shape = 'u32[]', space=smem, size = 0x4, offset = 0x4, fixed_abs, tag = 'smem constant byte address 0x4 - core index']
  #allocation1 [shape = 'u32[144,128]{1,0:T(1,128)}', space=vmem, size = 0x12000, scoped, tag = 'internal scratch']
  %s0 = inlined_call_operand.vmem [shape: f32[2,4,256], index: 0, kind: input, shape index: {}]
  %s1 = inlined_call_operand.vmem [shape: f32[2,4,1], index: 1, kind: input, shape index: {}]
  %s2 = inlined_call_operand.vmem [shape: f32[2,4,1], index: 2, kind: input, shape index: {}]
  %s3 = inlined_call_operand.vmem [shape: f32[2,4,256], index: 3, kind: output, shape index: {}]
  %s4 = sld [smem:[#allocation0]]
  $region22: #{conditional_norm.1} parent=0
    _
  %s6 = ssub.s32 1, %s4
  %s7 = scalar_select 0, %s6, %s4
  // Predicated region
  $region2: #{conditional_norm.1} parent=0 // pred_check
    _
  $region3: #{conditional_norm.1} parent=0 // pred_check_branch
    %9 = sbr.rel (0) target = $region5
  $region4: #{conditional_norm.1} parent=0 // pred_region
    _
  $region5: #{conditional_norm.1} parent=0 // pred_fallthru
    _
  // Predicated region
  $region6: #{conditional_norm.1} parent=0 // pred_check
    _
  $region7: #{conditional_norm.1} parent=0 // pred_check_branch
    %11 = sbr.rel (0) target = $region9
  $region8: #{conditional_norm.1} parent=0 // pred_region
    _
  $region9: #{conditional_norm.1} parent=0 // pred_fallthru
    _
  // Predicated region
  $region10: #{conditional_norm.1} parent=0 // pred_check
    _
  $region11: #{conditional_norm.1} parent=0 // pred_check_branch
    %13 = sbr.rel (0) target = $region13
  $region12: #{conditional_norm.1} parent=0 // pred_region
    _
  $region13: #{conditional_norm.1} parent=0 // pred_fallthru
    _
  %v14 = vld [vmem:[%s0] sm:$0xff]
  %v15 = vld [vmem:[%s0 + $0x8] sm:$0xff]
  %v18 = vcombine.high %v14, %v14
  %v19 = vcombine.high %v15, %v15
  %vm22 = vcmask 1043456
  %v23 = vsel %vm22, %v14, 0.0
  %v24 = vsel %vm22, %v18, 0.0
  %v25 = vadd.f32 %v23, %v24
  %26 = vadd.xlane.f32.xlu0 %v25
  %v27 = vpop.xlane.xlu0 %26
  %v28 = vsel %vm22, %v15, 0.0
  %v29 = vsel %vm22, %v19, 0.0
  %v30 = vadd.f32 %v28, %v29
  %31 = vadd.xlane.f32.xlu0 %v30
  %v32 = vpop.xlane.xlu0 %31
  %v33 = vmul.f32 %v14, %v14
  %v34 = vmul.f32 %v15, %v15
  %v37 = vcombine.high %v33, %v33
  %v38 = vcombine.high %v34, %v34
  %v41 = vsel %vm22, %v33, 0.0
  %v42 = vsel %vm22, %v37, 0.0
  %v43 = vadd.f32 %v41, %v42
  %44 = vadd.xlane.f32.xlu0 %v43
  %v45 = vpop.xlane.xlu0 %44
  %v46 = vsel %vm22, %v34, 0.0
  %v47 = vsel %vm22, %v38, 0.0
  %v48 = vadd.f32 %v46, %v47
  %49 = vadd.xlane.f32.xlu0 %v48
  %v50 = vpop.xlane.xlu0 %49
  %v51 = vsel %vm22, %v27, 0.0
  %v52 = vsel %vm22, %v32, 0.0
  %v53 = vadd.f32 %v51, %v52
  %v54 = vsel %vm22, %v45, 0.0
  %v55 = vsel %vm22, %v50, 0.0
  %v56 = vadd.f32 %v54, %v55
  %v57 = vmul.f32 %v53, 0.001953125
  %v58 = vmul.f32 %v56, 0.001953125
  %v59 = vmul.f32 %v57, %v57
  %v60 = vsub.f32 %v58, %v59
  %v61 = vmax.f32 %v60, 0.0
  %v62 = vadd.f32 %v61, 1e-05
  %v63 = vrsqrt.pop %v62
  %v64 = vld [vmem:[%s1] sm:$0xf]
  %v65 = vld [vmem:[%s1 + $0x4] sm:$0xf]
  %v66 = vmul.f32 %v64, %v63
  %v67 = vmul.f32 %v65, %v63
  %v68 = vld [vmem:[%s2] sm:$0xf]
  %v69 = vld [vmem:[%s2 + $0x4] sm:$0xf]
  %v70 = vmul.f32 %v57, %v66
  %v71 = vmul.f32 %v57, %v67
  %v72 = vsub.f32 %v68, %v70
  %v73 = vsub.f32 %v69, %v71
  %75 = vset.pattern.permute.xlu0 0
  %76 = vperm.xlu0 %75, %v66
  %v77 = vpop.permute.xlu0 %76
  %79 = vset.pattern.permute.xlu0 0
  %80 = vperm.xlu0 %79, %v67
  %v81 = vpop.permute.xlu0 %80
  %v83 = vunpack.c.l.s4 839922192
  %v84 = vunpack.c.0.s8 %v83
  %v85 = vlaneseq
  %v86 = vshrl.u32 %v85, 7
  %v87 = vsub.s32 %v84, %v86
  %v88 = vrot.slane %v77, %v87
  %v90 = vunpack.c.l.s4 839922192
  %v91 = vunpack.c.0.s8 %v90
  %v92 = vlaneseq
  %v93 = vshrl.u32 %v92, 7
  %v94 = vsub.s32 %v91, %v93
  %v95 = vrot.slane %v81, %v94
  %v98 = vmul.f32 %v14, %v88
  %v99 = vmul.f32 %v15, %v95
  %101 = vset.pattern.permute.xlu0 0
  %102 = vperm.xlu0 %101, %v72
  %v103 = vpop.permute.xlu0 %102
  %105 = vset.pattern.permute.xlu0 0
  %106 = vperm.xlu0 %105, %v73
  %v107 = vpop.permute.xlu0 %106
  %v109 = vunpack.c.l.s4 839922192
  %v110 = vunpack.c.0.s8 %v109
  %v111 = vlaneseq
  %v112 = vshrl.u32 %v111, 7
  %v113 = vsub.s32 %v110, %v112
  %v114 = vrot.slane %v103, %v113
  %v116 = vunpack.c.l.s4 839922192
  %v117 = vunpack.c.0.s8 %v116
  %v118 = vlaneseq
  %v119 = vshrl.u32 %v118, 7
  %v120 = vsub.s32 %v117, %v119
  %v121 = vrot.slane %v107, %v120
  %v124 = vadd.f32 %v98, %v114
  %v125 = vadd.f32 %v99, %v121
  %126 = vst [vmem:[%s3] sm:$0xff] %v124
  %127 = vst [vmem:[%s3 + $0x8] sm:$0xff] %v125
  // Predicated region
  $region14: #{conditional_norm.1} parent=0 // pred_check
    _
  $region15: #{conditional_norm.1} parent=0 // pred_check_branch
    %129 = sbr.rel (0) target = $region17
  $region16: #{conditional_norm.1} parent=0 // pred_region
    _
  $region17: #{conditional_norm.1} parent=0 // pred_fallthru
    _
  // Predicated region
  $region18: #{conditional_norm.1} parent=0 // pred_check
    _
  $region19: #{conditional_norm.1} parent=0 // pred_check_branch
    %131 = sbr.rel (0) target = $region21
  $region20: #{conditional_norm.1} parent=0 // pred_region
    _
  $region21: #{conditional_norm.1} parent=0 // pred_fallthru
    _

</llo_original>
